<compile_context>
chip_gen: v5e
topology: v5e:2x2
jax: 0.10.0
libtpu: 0.0.40
codegen_flags: <defaults>
</compile_context>

<pallas_src>
import jax
import jax.numpy as jnp
from jax.experimental import pallas as pl
from jax.experimental.pallas import tpu as pltpu


def _copy_kernel(x_ref, o_ref):
    # Chomp already applied by the BlockSpec windows: pure copy.
    o_ref[...] = x_ref[...]


def _slice_copy_kernel(x_ref, o_ref):
    # Input block is (<128 lanes) wider than the output block: trim in VMEM.
    o_ref[...] = x_ref[:, : o_ref.shape[-1]]


def _round_up(x: int, m: int) -> int:
    return -(-x // m) * m


def _round_down(x: int, m: int) -> int:
    return (x // m) * m


def _vmem_limit_bytes() -> int:
    """Per-generation scoped-VMEM limit: half of physical, capped at 64 MiB.

    v5e/v6e: 128 MiB physical -> 64 MiB limit.  v7x: 64 MiB -> 32 MiB limit.
    """
    try:
        cap = int(pltpu.get_tpu_info().vmem_capacity_bytes)
    except Exception:
        cap = 64 * 1024 * 1024  # conservative (v7x-sized) fallback
    return min(cap // 2, 64 * 1024 * 1024)


def chomp1d(x: jax.Array, chomp_size: int, *, tile_budget_bytes: int | None = None) -> jax.Array:
    """Pallas equivalent of PyTorch Chomp1d: x[:, :, :-chomp_size]."""
    assert chomp_size > 0, "chomp_size must be positive (x[:, :, :-0] is a caller bug)"
    n, c, l = x.shape
    l_out = l - chomp_size
    assert l_out > 0, "chomp_size must be smaller than the temporal length"

    # Collapse batch/channel into one row axis; contiguous reshape is free.
    r = n * c
    x2 = x.reshape(r, l)

    itemsize = jnp.dtype(x.dtype).itemsize
    pack = max(8, 32 // max(itemsize, 1))  # sublane pack: 8 f32, 16 bf16, 32 int8

    vmem_limit = _vmem_limit_bytes()
    # Double-buffered footprint is 2 * (in_tile + out_tile); target ~65% of the
    # scoped limit and keep headroom for the compiler.
    if tile_budget_bytes is None:
        tile_budget_bytes = int(vmem_limit * 0.65) // 2  # budget for (in + out) tile

    # --- L windowing ----------------------------------------------------------
    # Never DMA more than <128 chomped lanes per row.  Exception: if the rows
    # are tiny, a single contiguous full-row read beats a short-segment
    # windowed read (HBM burst efficiency), so keep the full row and trim.
    in_l = min(l, _round_up(l_out, 128))
    if l_out * itemsize < 512 and l * itemsize <= 1024:
        in_l = l
    out_l = l_out
    kernel = _copy_kernel if in_l == l_out else _slice_copy_kernel
    row_tile_bytes = (in_l + out_l) * itemsize

    l_tiled = False
    if pack * row_tile_bytes > tile_budget_bytes:
        # Rows too long for even a pack-row tile: add an L grid axis.
        l_tiled = True
        tile_l = _round_down(tile_budget_bytes // (2 * pack * itemsize), 128)
        tile_l = max(128, min(tile_l, _round_up(l_out, 128)))
        in_l = out_l = tile_l
        kernel = _copy_kernel  # partial tail L-block is masked by Pallas
        row_tile_bytes = 2 * tile_l * itemsize

    # --- row tiling -----------------------------------------------------------
    tile_r = max(pack, _round_down(tile_budget_bytes // row_tile_bytes, pack))

    # Keep >= MIN_STEPS grid steps when possible: pipelining on every gen, and
    # >=2 steps lets the "parallel" axis shard across v7x's two TensorCores.
    MIN_STEPS = 4
    l_steps = pl.cdiv(l_out, out_l) if l_tiled else 1
    if pl.cdiv(r, tile_r) * l_steps < MIN_STEPS:
        needed_row_steps = pl.cdiv(MIN_STEPS, l_steps)
        cap = max(pack, _round_up(pl.cdiv(r, needed_row_steps), pack))
        tile_r = min(tile_r, cap)
    if tile_r >= r:
        tile_r = r  # == full dim: always a legal block height

    # --- launch ---------------------------------------------------------------
    if l_tiled:
        read_cols = min(l, out_l * l_steps)
        grid = (pl.cdiv(r, tile_r), l_steps)
        in_specs = [pl.BlockSpec((tile_r, in_l), lambda i, j: (i, j))]
        out_specs = pl.BlockSpec((tile_r, out_l), lambda i, j: (i, j))
        dim_sem = ("parallel", "parallel")
    else:
        read_cols = in_l
        grid = (pl.cdiv(r, tile_r),)
        in_specs = [pl.BlockSpec((tile_r, in_l), lambda i: (i, 0))]
        out_specs = pl.BlockSpec((tile_r, out_l), lambda i: (i, 0))
        dim_sem = ("parallel",)

    cost = pl.CostEstimate(
        flops=0,
        transcendentals=0,
        bytes_accessed=int(r * (read_cols + l_out) * itemsize),
    )

    out2 = pl.pallas_call(
        kernel,
        out_shape=jax.ShapeDtypeStruct((r, l_out), x.dtype),
        grid=grid,
        in_specs=in_specs,
        out_specs=out_specs,
        compiler_params=pltpu.CompilerParams(
            dimension_semantics=dim_sem,
            vmem_limit_bytes=vmem_limit,
        ),
        cost_estimate=cost,
    )(x2)

    return out2.reshape(n, c, l_out)


if __name__ == "__main__":
    key = jax.random.PRNGKey(0)

    # 1) Typical small TCN intermediate: batch=2, channels=4, length=16,
    #    chomp_size = (kernel_size - 1) * dilation = 4.  (tiny-row path)
    N, C, L, CHOMP = 2, 4, 16, 4
    x = jax.random.normal(key, (N, C, L), dtype=jnp.float32)
    out = jax.block_until_ready(chomp1d(x, CHOMP))
    assert out.shape == (N, C, L - CHOMP) and out.dtype == x.dtype
    assert jnp.array_equal(out, x[:, :, :-CHOMP]), "mismatch (tiny-row path)"

    # 2) Lane-aligned windowed path (l_out % 128 == 0): chomp done purely by
    #    the input BlockSpec window, pure copy kernel.
    x2 = jax.random.normal(jax.random.PRNGKey(0), (2, 4, 140), dtype=jnp.float32)
    out2 = jax.block_until_ready(chomp1d(x2, 12))
    assert jnp.array_equal(out2, x2[:, :, :-12]), "mismatch (aligned path)"

    # 3) Misaligned windowed path: input window = round_up(l_out,128) < L, so
    #    the DMA'd waste is bounded (<128 lanes), tail trimmed in VMEM.
    x3 = jax.random.normal(jax.random.PRNGKey(0), (2, 4, 400), dtype=jnp.float32)
    out3 = jax.block_until_ready(chomp1d(x3, 200))
    assert jnp.array_equal(out3, x3[:, :, :-200]), "mismatch (misaligned path)"

    # 4) L-tiled path (2-D grid), forced with a small tile budget so shapes
    #    stay tiny; exercises partial input/output tail blocks.
    x4 = jax.random.normal(jax.random.PRNGKey(0), (2, 8, 505), dtype=jnp.float32)
    out4 = jax.block_until_ready(chomp1d(x4, 5, tile_budget_bytes=16 * 1024))
    assert jnp.array_equal(out4, x4[:, :, :-5]), "mismatch (L-tiled path)"

    print("KERNEL_OK")
</pallas_src>

<mosaic_0001>
module attributes {stable_mosaic.version = 11 : i64} {
  func.func @_slice_copy_kernel(%arg0: i32, %arg1: memref<8x16xf32, #tpu.memory_space<vmem>>, %arg2: memref<8x12xf32, #tpu.memory_space<vmem>>) attributes {dimension_semantics = [#tpu.dimension_semantics<parallel>], iteration_bounds = array<i64: 1>, scalar_prefetch = 0 : i64, scratch_operands = 0 : i64, tpu.core_type = #tpu.core_type<tc>, window_params = [{transform_indices = @transform_0, window_bounds = array<i64: 8, 16>}, {transform_indices = @transform_1, window_bounds = array<i64: 8, 12>}]} {
    %c0 = arith.constant 0 : index
    %c0_0 = arith.constant 0 : index
    %0 = vector.load %arg1[%c0, %c0_0] : memref<8x16xf32, #tpu.memory_space<vmem>>, vector<8x12xf32>
    %c0_1 = arith.constant 0 : index
    %c0_2 = arith.constant 0 : index
    %1 = vector.load %arg2[%c0_1, %c0_2] : memref<8x12xf32, #tpu.memory_space<vmem>>, vector<8x12xf32>
    tpu.vector_store %arg2[%c0_1, %c0_2], %0 {strides = array<i32>} : memref<8x12xf32, #tpu.memory_space<vmem>>, vector<8x12xf32>,
    return
  }
  func.func @transform_0(%arg0: i32) -> (i32, i32) {
    %c0_i32 = arith.constant 0 : i32
    %c0_i32_0 = arith.constant 0 : i32
    return %arg0, %c0_i32 : i32, i32
  }
  func.func @transform_1(%arg0: i32) -> (i32, i32) {
    %c0_i32 = arith.constant 0 : i32
    %c0_i32_0 = arith.constant 0 : i32
    return %arg0, %c0_i32 : i32, i32
  }
}

</mosaic_0001>

<llo_original>
// kernel: tpu_custom_call.1
$region0: #{tpu_custom_call.1}
  #allocation0 [shape = 'u32[]', space=smem, size = 0x4, offset = 0x4, fixed_abs, tag = 'smem constant byte address 0x4 - core index']
  #allocation1 [shape = 'u32[72,128]{1,0:T(1,128)}', space=vmem, size = 0x9000, scoped, tag = 'internal scratch']
  %s0 = inlined_call_operand.hbm [shape: f32[8,16], index: 0, kind: input, shape index: {}]
  %s1 = inlined_call_operand.hbm [shape: f32[8,12], index: 1, kind: output, shape index: {}]
  %s2 = sld [smem:[#allocation0]]
  $region18: #{tpu_custom_call.1} parent=0
    _
  %s4 = ssub.s32 1, %s2
  %s5 = scalar_select 0, %s4, %s2
  $region1: #{tpu_custom_call.1} parent=0
    #allocation2 [shape = 'u8[4096]{0}', space=vmem, size = 0x1000, scoped, tag = 'input window, operand 0, single buffered']
    #allocation3 [shape = 's32[1]{0}', space=sflag, size = 0x4, scoped, tag = 'scoped memory for tpu_custom_call.1']
    #allocation4 [shape = 's32[1]{0}', space=sflag, size = 0x4, scoped, tag = 'scoped memory for tpu_custom_call.1']
    #allocation5 [shape = 'u8[4096]{0}', space=vmem, size = 0x1000, scoped, tag = 'output window, operand 0, single buffered']
    %6 = vsyncpa [#allocation3], 0
    %7 = vsyncpa [#allocation4], 0
    // Predicated region
    $region2: #{tpu_custom_call.1} parent=1 // pred_check
      _
    $region3: #{tpu_custom_call.1} parent=1 // pred_check_branch
      %9 = sbr.rel (0) target = $region5
    $region4: #{tpu_custom_call.1} parent=1 // pred_region
      %11 = vsyncadd [#allocation3], 0
      %s13 = sshll.u32 %s0, 4
      %s14 = int_to_ptr.hbm [resolvable:$true] %s13
      %s15 = sshll.u32 [#allocation2], 4
      %s16 = int_to_ptr.vmem [resolvable:$true] %s15
      %18 = dma.hbm_to_vmem [thread:$0]  %s14, 128, %s16, [#allocation3]
    $region5: #{tpu_custom_call.1} parent=1 // pred_fallthru
      _
    // Predicated region
    $region6: #{tpu_custom_call.1} parent=1 // pred_check
      _
    $region7: #{tpu_custom_call.1} parent=1 // pred_check_branch
      %20 = sbr.rel (0) target = $region9
    $region8: #{tpu_custom_call.1} parent=1 // pred_region
      %22 = dma.done [#allocation3], 128
    $region9: #{tpu_custom_call.1} parent=1 // pred_fallthru
      _
    %v23 = vld [vmem:[#allocation2] sm:$0xff]
    %vm24 = vcmask 97280
    %25 = vst.msk [vmem:[#allocation5] sm:$0xff] %vm24, %v23
    // Predicated region
    $region10: #{tpu_custom_call.1} parent=1 // pred_check
      _
    $region11: #{tpu_custom_call.1} parent=1 // pred_check_branch
      %27 = sbr.rel (0) target = $region13
    $region12: #{tpu_custom_call.1} parent=1 // pred_region
      %29 = vsyncadd [#allocation4], 0
      %s31 = sshll.u32 [#allocation5], 4
      %s32 = int_to_ptr.vmem [resolvable:$true] %s31
      %s33 = sshll.u32 %s1, 4
      %s34 = int_to_ptr.hbm [resolvable:$true] %s33
      %36 = dma.vmem_to_hbm [thread:$0]  %s32, 128, %s34, [#allocation4]
    $region13: #{tpu_custom_call.1} parent=1 // pred_fallthru
      _
    // Predicated region
    $region14: #{tpu_custom_call.1} parent=1 // pred_check
      _
    $region15: #{tpu_custom_call.1} parent=1 // pred_check_branch
      %38 = sbr.rel (0) target = $region17
    $region16: #{tpu_custom_call.1} parent=1 // pred_region
      %40 = dma.done [#allocation4], 128
    $region17: #{tpu_custom_call.1} parent=1 // pred_fallthru
      _
    %41 = vsyncpa [#allocation3], 1
    %42 = vsyncpa [#allocation4], 1

</llo_original>
